<compile_context>
chip_gen: v7x
topology: tpu7x:2x2x1
jax: 0.10.0
libtpu: 0.0.40
codegen_flags: <defaults>
</compile_context>

<pallas_src>
import functools

import jax
import jax.numpy as jnp
from jax.experimental import pallas as pl
from jax.experimental.pallas import tpu as pltpu


# --------------------- fused Linear (+bias, +activation) kernel ---------------------
def _linear_act_kernel(x_ref, w_ref, b_ref, o_ref, *, act):
    # Single full-K matmul step: no accumulator scratch needed.
    r = jnp.dot(x_ref[...], w_ref[...], preferred_element_type=jnp.float32)
    r = r + b_ref[...]
    if act == "relu":
        r = jnp.maximum(r, 0.0)
    elif act == "sigmoid":
        r = 1.0 / (1.0 + jnp.exp(-r))
    o_ref[...] = r.astype(o_ref.dtype)


def _pick_tile(dim, preferred=(256, 128)):
    """Largest preferred tile that evenly divides `dim`; else the full extent."""
    for t in preferred:
        if dim >= t and dim % t == 0:
            return t
    return dim


def linear_act(x, w_t, b2d, *, act):
    """y = act(x @ w_t + b).  x:(M,K), w_t:(K,N) (pre-transposed), b2d:(1,N)."""
    M, K = x.shape
    K2, N = w_t.shape
    assert K == K2, (K, K2)
    tm = _pick_tile(M)
    tn = _pick_tile(N)

    return pl.pallas_call(
        functools.partial(_linear_act_kernel, act=act),
        out_shape=jax.ShapeDtypeStruct((M, N), jnp.float32),
        grid_spec=pltpu.PrefetchScalarGridSpec(
            num_scalar_prefetch=0,
            grid=(M // tm, N // tn),
            in_specs=[
                pl.BlockSpec((tm, K), lambda i, j: (i, 0)),   # full-K slab of x
                pl.BlockSpec((K, tn), lambda i, j: (0, j)),   # full-K slab of w
                pl.BlockSpec((1, tn), lambda i, j: (0, j)),   # bias tile
            ],
            out_specs=pl.BlockSpec((tm, tn), lambda i, j: (i, j)),
        ),
        compiler_params=pltpu.CompilerParams(
            dimension_semantics=("parallel", "parallel")),
    )(x, w_t, b2d)


# --------------------- forward pass ---------------------
def camera_param_regressor_forward(params, x):
    n = x.shape[0]
    x = x.reshape(n, -1).astype(jnp.float32)          # nn.Flatten()
    # TODO(synk): nn.Dropout(p=0.5) is identity in eval mode; training-mode
    # (stochastic) dropout is not implemented here.
    x = linear_act(x, params["w1"], params["b1"], act="relu")     # D -> 1024, ReLU
    x = linear_act(x, params["w2"], params["b2"], act="relu")     # 1024 -> 128, ReLU
    x = linear_act(x, params["w3"], params["b3"], act="sigmoid")  # 128 -> 3, Sigmoid
    return x


# --------------------- parameter init (PyTorch nn.Linear defaults) ---------------------
def init_params(key, input_size):
    d_in = input_size + 1
    dims = [(d_in, 1024), (1024, 128), (128, 3)]
    params = {}
    ks = jax.random.split(key, len(dims))
    for idx, ((fan_in, fan_out), k) in enumerate(zip(dims, ks), start=1):
        kw, kb = jax.random.split(k)
        bound = 1.0 / (fan_in ** 0.5)
        # PyTorch layout: weight (out, in), bias (out,)
        w = jax.random.uniform(kw, (fan_out, fan_in), jnp.float32, -bound, bound)
        b = jax.random.uniform(kb, (fan_out,), jnp.float32, -bound, bound)
        # Pre-transpose / pre-reshape once, outside the per-call forward path.
        params[f"w{idx}"] = jnp.transpose(w)            # (in, out)
        params[f"b{idx}"] = b.reshape(1, fan_out)       # (1, out)
    return params


if __name__ == "__main__":
    # Flattened feature count must equal input_size + 1 (e.g. features ++ Z).
    input_size = 255                                   # -> D = 256 = 1*16*16
    x = jax.random.normal(jax.random.PRNGKey(0), (2, 1, 16, 16), dtype=jnp.float32)
    params = init_params(jax.random.PRNGKey(1), input_size)

    fwd = jax.jit(camera_param_regressor_forward)
    out = jax.block_until_ready(fwd(params, x))

    assert out.shape == (2, 3), out.shape
    assert bool(jnp.all(jnp.isfinite(out)))
    assert bool(jnp.all((out >= 0.0) & (out <= 1.0)))  # Sigmoid range
    print("KERNEL_OK")
</pallas_src>

<mosaic_0001>
module attributes {stable_mosaic.version = 11 : i64} {
  func.func @_linear_act_kernel(%arg0: i32, %arg1: i32, %arg2: memref<2x256xf32, #tpu.memory_space<vmem>>, %arg3: memref<256x256xf32, #tpu.memory_space<vmem>>, %arg4: memref<1x256xf32, #tpu.memory_space<vmem>>, %arg5: memref<2x256xf32, #tpu.memory_space<vmem>>) attributes {dimension_semantics = [#tpu.dimension_semantics<parallel>, #tpu.dimension_semantics<parallel>], iteration_bounds = array<i64: 1, 4>, scalar_prefetch = 0 : i64, scratch_operands = 0 : i64, tpu.core_type = #tpu.core_type<tc>, window_params = [{transform_indices = @transform_0, window_bounds = array<i64: 2, 256>}, {transform_indices = @transform_1, window_bounds = array<i64: 256, 256>}, {transform_indices = @transform_2, window_bounds = array<i64: 1, 256>}, {transform_indices = @transform_3, window_bounds = array<i64: 2, 256>}]} {
    %c0 = arith.constant 0 : index
    %c0_0 = arith.constant 0 : index
    %0 = vector.load %arg2[%c0, %c0_0] : memref<2x256xf32, #tpu.memory_space<vmem>>, vector<2x256xf32>
    %c0_1 = arith.constant 0 : index
    %c0_2 = arith.constant 0 : index
    %1 = vector.load %arg3[%c0_1, %c0_2] : memref<256x256xf32, #tpu.memory_space<vmem>>, vector<256x256xf32>
    %cst = arith.constant dense<0.000000e+00> : vector<2x256xf32>
    %2 = tpu.matmul %0, %1, %cst {dimension_numbers = #tpu.dot_dimension_numbers<[1], [0], [0], [1], [0, 0, 1, 1], [], []>} : vector<2x256xf32>, vector<256x256xf32>, vector<2x256xf32> -> vector<2x256xf32>
    %c0_3 = arith.constant 0 : index
    %c0_4 = arith.constant 0 : index
    %3 = vector.load %arg4[%c0_3, %c0_4] : memref<1x256xf32, #tpu.memory_space<vmem>>, vector<1x256xf32>
    %4 = vector.broadcast %3 : vector<1x256xf32> to vector<2x256xf32>
    %5 = arith.addf %2, %4 : vector<2x256xf32>
    %cst_5 = arith.constant 0.000000e+00 : f32
    %6 = vector.broadcast %cst_5 : f32 to vector<2x256xf32>
    %7 = arith.maximumf %5, %6 : vector<2x256xf32>
    %c0_6 = arith.constant 0 : index
    %c0_7 = arith.constant 0 : index
    %8 = vector.load %arg5[%c0_6, %c0_7] : memref<2x256xf32, #tpu.memory_space<vmem>>, vector<2x256xf32>
    tpu.vector_store %arg5[%c0_6, %c0_7], %7 {strides = array<i32>} : memref<2x256xf32, #tpu.memory_space<vmem>>, vector<2x256xf32>,
    return
  }
  func.func @transform_0(%arg0: i32, %arg1: i32) -> (i32, i32) {
    %c0_i32 = arith.constant 0 : i32
    %c0_i32_0 = arith.constant 0 : i32
    return %arg0, %c0_i32 : i32, i32
  }
  func.func @transform_1(%arg0: i32, %arg1: i32) -> (i32, i32) {
    %c0_i32 = arith.constant 0 : i32
    %c0_i32_0 = arith.constant 0 : i32
    return %c0_i32, %arg1 : i32, i32
  }
  func.func @transform_2(%arg0: i32, %arg1: i32) -> (i32, i32) {
    %c0_i32 = arith.constant 0 : i32
    %c0_i32_0 = arith.constant 0 : i32
    return %c0_i32, %arg1 : i32, i32
  }
  func.func @transform_3(%arg0: i32, %arg1: i32) -> (i32, i32) {
    %c0_i32 = arith.constant 0 : i32
    return %arg0, %arg1 : i32, i32
  }
}

module attributes {stable_mosaic.version = 11 : i64} {
  func.func @_linear_act_kernel(%arg0: i32, %arg1: i32, %arg2: memref<2x1024xf32, #tpu.memory_space<vmem>>, %arg3: memref<1024x128xf32, #tpu.memory_space<vmem>>, %arg4: memref<1x128xf32, #tpu.memory_space<vmem>>, %arg5: memref<2x128xf32, #tpu.memory_space<vmem>>) attributes {dimension_semantics = [#tpu.dimension_semantics<parallel>, #tpu.dimension_semantics<parallel>], iteration_bounds = array<i64: 1, 1>, scalar_prefetch = 0 : i64, scratch_operands = 0 : i64, tpu.core_type = #tpu.core_type<tc>, window_params = [{transform_indices = @transform_0, window_bounds = array<i64: 2, 1024>}, {transform_indices = @transform_1, window_bounds = array<i64: 1024, 128>}, {transform_indices = @transform_2, window_bounds = array<i64: 1, 128>}, {transform_indices = @transform_3, window_bounds = array<i64: 2, 128>}]} {
    %c0 = arith.constant 0 : index
    %c0_0 = arith.constant 0 : index
    %0 = vector.load %arg2[%c0, %c0_0] : memref<2x1024xf32, #tpu.memory_space<vmem>>, vector<2x1024xf32>
    %c0_1 = arith.constant 0 : index
    %c0_2 = arith.constant 0 : index
    %1 = vector.load %arg3[%c0_1, %c0_2] : memref<1024x128xf32, #tpu.memory_space<vmem>>, vector<1024x128xf32>
    %cst = arith.constant dense<0.000000e+00> : vector<2x128xf32>
    %2 = tpu.matmul %0, %1, %cst {dimension_numbers = #tpu.dot_dimension_numbers<[1], [0], [0], [1], [0, 0, 1, 1], [], []>} : vector<2x1024xf32>, vector<1024x128xf32>, vector<2x128xf32> -> vector<2x128xf32>
    %c0_3 = arith.constant 0 : index
    %c0_4 = arith.constant 0 : index
    %3 = vector.load %arg4[%c0_3, %c0_4] : memref<1x128xf32, #tpu.memory_space<vmem>>, vector<1x128xf32>
    %4 = vector.broadcast %3 : vector<1x128xf32> to vector<2x128xf32>
    %5 = arith.addf %2, %4 : vector<2x128xf32>
    %cst_5 = arith.constant 0.000000e+00 : f32
    %6 = vector.broadcast %cst_5 : f32 to vector<2x128xf32>
    %7 = arith.maximumf %5, %6 : vector<2x128xf32>
    %c0_6 = arith.constant 0 : index
    %c0_7 = arith.constant 0 : index
    %8 = vector.load %arg5[%c0_6, %c0_7] : memref<2x128xf32, #tpu.memory_space<vmem>>, vector<2x128xf32>
    tpu.vector_store %arg5[%c0_6, %c0_7], %7 {strides = array<i32>} : memref<2x128xf32, #tpu.memory_space<vmem>>, vector<2x128xf32>,
    return
  }
  func.func @transform_0(%arg0: i32, %arg1: i32) -> (i32, i32) {
    %c0_i32 = arith.constant 0 : i32
    %c0_i32_0 = arith.constant 0 : i32
    return %arg0, %c0_i32 : i32, i32
  }
  func.func @transform_1(%arg0: i32, %arg1: i32) -> (i32, i32) {
    %c0_i32 = arith.constant 0 : i32
    %c0_i32_0 = arith.constant 0 : i32
    return %c0_i32, %arg1 : i32, i32
  }
  func.func @transform_2(%arg0: i32, %arg1: i32) -> (i32, i32) {
    %c0_i32 = arith.constant 0 : i32
    %c0_i32_0 = arith.constant 0 : i32
    return %c0_i32, %arg1 : i32, i32
  }
  func.func @transform_3(%arg0: i32, %arg1: i32) -> (i32, i32) {
    %c0_i32 = arith.constant 0 : i32
    return %arg0, %arg1 : i32, i32
  }
}

module attributes {stable_mosaic.version = 11 : i64} {
  func.func @_linear_act_kernel(%arg0: i32, %arg1: i32, %arg2: memref<2x128xf32, #tpu.memory_space<vmem>>, %arg3: memref<128x3xf32, #tpu.memory_space<vmem>>, %arg4: memref<1x3xf32, #tpu.memory_space<vmem>>, %arg5: memref<2x3xf32, #tpu.memory_space<vmem>>) attributes {dimension_semantics = [#tpu.dimension_semantics<parallel>, #tpu.dimension_semantics<parallel>], iteration_bounds = array<i64: 1, 1>, scalar_prefetch = 0 : i64, scratch_operands = 0 : i64, tpu.core_type = #tpu.core_type<tc>, window_params = [{transform_indices = @transform_0, window_bounds = array<i64: 2, 128>}, {transform_indices = @transform_1, window_bounds = array<i64: 128, 3>}, {transform_indices = @transform_2, window_bounds = array<i64: 1, 3>}, {transform_indices = @transform_3, window_bounds = array<i64: 2, 3>}]} {
    %c0 = arith.constant 0 : index
    %c0_0 = arith.constant 0 : index
    %0 = vector.load %arg2[%c0, %c0_0] : memref<2x128xf32, #tpu.memory_space<vmem>>, vector<2x128xf32>
    %c0_1 = arith.constant 0 : index
    %c0_2 = arith.constant 0 : index
    %1 = vector.load %arg3[%c0_1, %c0_2] : memref<128x3xf32, #tpu.memory_space<vmem>>, vector<128x3xf32>
    %cst = arith.constant dense<0.000000e+00> : vector<2x3xf32>
    %2 = tpu.matmul %0, %1, %cst {dimension_numbers = #tpu.dot_dimension_numbers<[1], [0], [0], [1], [0, 0, 1, 1], [], []>} : vector<2x128xf32>, vector<128x3xf32>, vector<2x3xf32> -> vector<2x3xf32>
    %c0_3 = arith.constant 0 : index
    %c0_4 = arith.constant 0 : index
    %3 = vector.load %arg4[%c0_3, %c0_4] : memref<1x3xf32, #tpu.memory_space<vmem>>, vector<1x3xf32>
    %4 = vector.broadcast %3 : vector<1x3xf32> to vector<2x3xf32>
    %5 = arith.addf %2, %4 : vector<2x3xf32>
    %cst_5 = arith.constant 0.000000e+00 : f32
    %6 = vector.broadcast %cst_5 : f32 to vector<2x3xf32>
    %7 = arith.subf %6, %5 : vector<2x3xf32>
    %8 = math.exp %7 : vector<2x3xf32>
    %cst_6 = arith.constant 1.000000e+00 : f32
    %9 = vector.broadcast %cst_6 : f32 to vector<2x3xf32>
    %10 = arith.addf %9, %8 : vector<2x3xf32>
    %cst_7 = arith.constant 1.000000e+00 : f32
    %11 = vector.broadcast %cst_7 : f32 to vector<2x3xf32>
    %12 = arith.divf %11, %10 : vector<2x3xf32>
    %c0_8 = arith.constant 0 : index
    %c0_9 = arith.constant 0 : index
    %13 = vector.load %arg5[%c0_8, %c0_9] : memref<2x3xf32, #tpu.memory_space<vmem>>, vector<2x3xf32>
    tpu.vector_store %arg5[%c0_8, %c0_9], %12 {strides = array<i32>} : memref<2x3xf32, #tpu.memory_space<vmem>>, vector<2x3xf32>,
    return
  }
  func.func @transform_0(%arg0: i32, %arg1: i32) -> (i32, i32) {
    %c0_i32 = arith.constant 0 : i32
    %c0_i32_0 = arith.constant 0 : i32
    return %arg0, %c0_i32 : i32, i32
  }
  func.func @transform_1(%arg0: i32, %arg1: i32) -> (i32, i32) {
    %c0_i32 = arith.constant 0 : i32
    %c0_i32_0 = arith.constant 0 : i32
    return %c0_i32, %arg1 : i32, i32
  }
  func.func @transform_2(%arg0: i32, %arg1: i32) -> (i32, i32) {
    %c0_i32 = arith.constant 0 : i32
    %c0_i32_0 = arith.constant 0 : i32
    return %c0_i32, %arg1 : i32, i32
  }
  func.func @transform_3(%arg0: i32, %arg1: i32) -> (i32, i32) {
    %c0_i32 = arith.constant 0 : i32
    return %arg0, %arg1 : i32, i32
  }
}

</mosaic_0001>

<llo_original>
// kernel: camera_param_regressor_forward.5
$region0: #{camera_param_regressor_forward.5}
  #allocation0 [shape = 'u32[]', space=smem, size = 0x4, offset = 0x4, fixed_abs, tag = 'smem constant byte address 0x4 - core index']
  #allocation1 [shape = 'u32[144,128]{1,0:T(1,128)}', space=vmem, size = 0x12000, scoped, tag = 'internal scratch']
  %s0 = inlined_call_operand.vmem [shape: f32[2,128], index: 0, kind: input, shape index: {}]
  %s1 = inlined_call_operand.vmem [shape: f32[128,3], index: 1, kind: input, shape index: {}]
  %s2 = inlined_call_operand.vmem [shape: f32[1,3], index: 2, kind: input, shape index: {}]
  %s3 = inlined_call_operand.hbm [shape: f32[2,3], index: 3, kind: output, shape index: {}]
  %s4 = sld [smem:[#allocation0]]
  $region22: #{camera_param_regressor_forward.5} parent=0
    _
  %s6 = ssub.s32 1, %s4
  %s7 = scalar_select 0, %s6, %s4
  $region1: #{camera_param_regressor_forward.5} parent=0
    #allocation2 [shape = 'u8[1024]{0}', space=vmem, size = 0x400, scoped, tag = 'output window, operand 0, single buffered']
    #allocation3 [shape = 's32[1]{0}', space=sflag, size = 0x4, scoped, tag = 'scoped memory for camera_param_regressor_forward.5']
    %8 = vsyncpa [#allocation3], 0
    // Predicated region
    $region2: #{camera_param_regressor_forward.5} parent=1 // pred_check
      _
    $region3: #{camera_param_regressor_forward.5} parent=1 // pred_check_branch
      %10 = sbr.rel (0) target = $region5
    $region4: #{camera_param_regressor_forward.5} parent=1 // pred_region
      _
    $region5: #{camera_param_regressor_forward.5} parent=1 // pred_fallthru
      _
    // Predicated region
    $region6: #{camera_param_regressor_forward.5} parent=1 // pred_check
      _
    $region7: #{camera_param_regressor_forward.5} parent=1 // pred_check_branch
      %12 = sbr.rel (0) target = $region9
    $region8: #{camera_param_regressor_forward.5} parent=1 // pred_region
      _
    $region9: #{camera_param_regressor_forward.5} parent=1 // pred_fallthru
      _
    // Predicated region
    $region10: #{camera_param_regressor_forward.5} parent=1 // pred_check
      _
    $region11: #{camera_param_regressor_forward.5} parent=1 // pred_check_branch
      %14 = sbr.rel (0) target = $region13
    $region12: #{camera_param_regressor_forward.5} parent=1 // pred_region
      _
    $region13: #{camera_param_regressor_forward.5} parent=1 // pred_fallthru
      _
    %v15 = vld [vmem:[%s0] sm:$0x3]
    %v16 = vld [vmem:[%s1] sm:$0xff]
    %v17 = vld [vmem:[%s1 + $0x8] sm:$0xff]
    %v18 = vld [vmem:[%s1 + $0x10] sm:$0xff]
    %v19 = vld [vmem:[%s1 + $0x18] sm:$0xff]
    %v20 = vld [vmem:[%s1 + $0x20] sm:$0xff]
    %v21 = vld [vmem:[%s1 + $0x28] sm:$0xff]
    %v22 = vld [vmem:[%s1 + $0x30] sm:$0xff]
    %v23 = vld [vmem:[%s1 + $0x38] sm:$0xff]
    %v24 = vld [vmem:[%s1 + $0x40] sm:$0xff]
    %v25 = vld [vmem:[%s1 + $0x48] sm:$0xff]
    %v26 = vld [vmem:[%s1 + $0x50] sm:$0xff]
    %v27 = vld [vmem:[%s1 + $0x58] sm:$0xff]
    %v28 = vld [vmem:[%s1 + $0x60] sm:$0xff]
    %v29 = vld [vmem:[%s1 + $0x68] sm:$0xff]
    %v30 = vld [vmem:[%s1 + $0x70] sm:$0xff]
    %v31 = vld [vmem:[%s1 + $0x78] sm:$0xff]
    %v32 = vld [vmem:[%s2] sm:$0x1]
    %v34 = vlaneseq
    %v35 = vshrl.u32 %v34, 7
    %v36 = vsub.s32 0, %v35
    %v37 = vrot.slane %v32, %v36
    %39 = vmatprep.subr.mxu0 0.0
    %40 = vmatpush1.msra.mxu0 %v16
    %41 = vmatprep.subr.mxu0 0.0
    %42 = vmatpush1.msra.mxu0 %v17
    %43 = vmatprep.subr.mxu0 0.0
    %44 = vmatpush1.msra.mxu0 %v18
    %45 = vmatprep.subr.mxu0 0.0
    %46 = vmatpush1.msra.mxu0 %v19
    %47 = vmatprep.subr.mxu0 0.0
    %48 = vmatpush1.msra.mxu0 %v20
    %49 = vmatprep.subr.mxu0 0.0
    %50 = vmatpush1.msra.mxu0 %v21
    %51 = vmatprep.subr.mxu0 0.0
    %52 = vmatpush1.msra.mxu0 %v22
    %53 = vmatprep.subr.mxu0 0.0
    %54 = vmatpush1.msra.mxu0 %v23
    %55 = vmatprep.subr.mxu0 0.0
    %56 = vmatpush1.msra.mxu0 %v24
    %57 = vmatprep.subr.mxu0 0.0
    %58 = vmatpush1.msra.mxu0 %v25
    %59 = vmatprep.subr.mxu0 0.0
    %60 = vmatpush1.msra.mxu0 %v26
    %61 = vmatprep.subr.mxu0 0.0
    %62 = vmatpush1.msra.mxu0 %v27
    %63 = vmatprep.subr.mxu0 0.0
    %64 = vmatpush1.msra.mxu0 %v28
    %65 = vmatprep.subr.mxu0 0.0
    %66 = vmatpush1.msra.mxu0 %v29
    %67 = vmatprep.subr.mxu0 0.0
    %68 = vmatpush1.msra.mxu0 %v30
    %69 = vmatprep.subr.mxu0 0.0
    %70 = vmatpush1.msra.mxu0 %v31
    %71 = vmatprep.subr.mxu0 0.0
    %72 = vmatpush1.msra.mxu0 0.0
    %73 = vmatprep.subr.mxu0 0.0
    %74 = vmatpush1.msra.mxu0 0.0
    %75 = vmatprep.subr.mxu0 0.0
    %76 = vmatpush1.msra.mxu0 0.0
    %77 = vmatprep.subr.mxu0 0.0
    %78 = vmatpush1.msra.mxu0 0.0
    %79 = vmatprep.subr.mxu0 0.0
    %80 = vmatpush1.msra.mxu0 0.0
    %81 = vmatprep.subr.mxu0 0.0
    %82 = vmatpush1.msra.mxu0 0.0
    %83 = vmatprep.subr.mxu0 0.0
    %84 = vmatpush1.msra.mxu0 0.0
    %85 = vmatprep.subr.mxu0 0.0
    %86 = vmatpush1.msra.mxu0 0.0
    %87 = vmatprep.subr.mxu0 0.0
    %88 = vmatpush1.msra.mxu0 0.0
    %89 = vmatprep.subr.mxu0 0.0
    %90 = vmatpush1.msra.mxu0 0.0
    %91 = vmatprep.subr.mxu0 0.0
    %92 = vmatpush1.msra.mxu0 0.0
    %93 = vmatprep.subr.mxu0 0.0
    %94 = vmatpush1.msra.mxu0 0.0
    %95 = vmatprep.subr.mxu0 0.0
    %96 = vmatpush1.msra.mxu0 0.0
    %97 = vmatprep.subr.mxu0 0.0
    %98 = vmatpush1.msra.mxu0 0.0
    %99 = vmatprep.subr.mxu0 0.0
    %100 = vmatpush1.msra.mxu0 0.0
    %101 = vmatprep.subr.mxu0 0.0
    %102 = vmatpush1.msra.mxu0 0.0
    %103 = vmatprep.mubr.f32.mxu0 0.0
    %104 = vmatmul.mubr.f32.gmra.mrb[0].mxu0 %v15
    %v105 = vpop.f32.mrb[0].mxu0
    %v106 = vadd.f32 %v37, %v105
    %v107 = vpop.f32.mrb[0].mxu0
    %108 = vdwg.mxu0
    %v109 = vsub.f32 0.0, %v106
    %v110 = vmul.f32 %v109, 1.442695
    %v111 = vpow.pop %v110
    %v112 = vadd.f32 %v111, 1.0
    %v113 = vrcp.pop %v112
    %v114 = vmul.f32 1.0, %v113
    %vm115 = vcmask 17408
    %116 = vst.msk [vmem:[#allocation2] sm:$0x3] %vm115, %v114
    // Predicated region
    $region14: #{camera_param_regressor_forward.5} parent=1 // pred_check
      _
    $region15: #{camera_param_regressor_forward.5} parent=1 // pred_check_branch
      %118 = sbr.rel (0) target = $region17
    $region16: #{camera_param_regressor_forward.5} parent=1 // pred_region
      %s120 = ssub.s32 32, 32
      %121 = vsyncadd [#allocation3], %s120
      %s123 = sshll.u32 [#allocation2], 4
      %s124 = int_to_ptr.vmem [resolvable:$true] %s123
      %126 = dma.vmem_to_hbm [thread:$0]  %s124, 32, %s3, [#allocation3]
    $region17: #{camera_param_regressor_forward.5} parent=1 // pred_fallthru
      _
    // Predicated region
    $region18: #{camera_param_regressor_forward.5} parent=1 // pred_check
      _
    $region19: #{camera_param_regressor_forward.5} parent=1 // pred_check_branch
      %128 = sbr.rel (0) target = $region21
    $region20: #{camera_param_regressor_forward.5} parent=1 // pred_region
      %129 = dma.done [#allocation3], 32
    $region21: #{camera_param_regressor_forward.5} parent=1 // pred_fallthru
      _
    %130 = vsyncpa [#allocation3], 1

// kernel: camera_param_regressor_forward.3
$region0: #{camera_param_regressor_forward.3}
  #allocation0 [shape = 'u32[]', space=smem, size = 0x4, offset = 0x4, fixed_abs, tag = 'smem constant byte address 0x4 - core index']
  #allocation1 [shape = 'u32[144,128]{1,0:T(1,128)}', space=vmem, size = 0x12000, scoped, tag = 'internal scratch']
  %s0 = inlined_call_operand.vmem [shape: f32[2,256], index: 0, kind: input, shape index: {}]
  %s1 = inlined_call_operand.hbm [shape: f32[256,1024], index: 1, kind: input, shape index: {}]
  %s2 = inlined_call_operand.vmem [shape: f32[1,1024], index: 2, kind: input, shape index: {}]
  %s3 = inlined_call_operand.vmem [shape: f32[2,1024], index: 3, kind: output, shape index: {}]
  %s4 = sld [smem:[#allocation0]]
  $region49: #{camera_param_regressor_forward.3} parent=0
    _
  %s6 = ssub.s32 1, %s4
  %s7 = scalar_select 0, %s6, %s4
  $region1: #{camera_param_regressor_forward.3} parent=0
    #allocation2 [shape = 'u8[524288]{0}', space=vmem, size = 0x80000, scoped, tag = 'input window, operand 1']
    #allocation3 [shape = 's32[2]{0}', space=sflag, size = 0x8, scoped, tag = 'scoped memory for camera_param_regressor_forward.3']
    %8 = vsyncpa [#allocation3], 0
    %s9 = scalar_lea.sflag [#allocation3], 1
    %10 = vsyncpa %s9, 0
    loop: start=0, step=1, limit=6
    $region2: #{camera_param_regressor_forward.3} parent=1 // loop_pre_header
      _
    $region3: #{camera_param_regressor_forward.3} parent=1 // loop_header
      %s12 = sphi 0, %s16
      %p13 = scmp.ge.s32.totalorder %s12, 6
      %s19 = sphi 0, %s31
      %s20 = sphi 0, %s27
      %s21 = sphi 0, %s19
      %s22 = sphi 0, %s20
      %s23 = sphi 0, %s21
      %s24 = sphi 0, %s22
      %s34 = sphi 0, %s36
      %s37 = sphi 0, %s34
      %s38 = sphi 0, %s37
      %s54 = sphi 0, %s38
      %s60 = sphi 0, %s62
      %s63 = sphi 0, %s60
      %s64 = sphi 0, %s63
      %s80 = sphi 0, %s64
      %s86 = sphi 0, %s88
      %s89 = sphi 0, %s86
      %s90 = sphi 0, %s89
      %s106 = sphi 0, %s90
      %s114 = sphi 0, %s116
      %s117 = sphi 0, %s114
      %s118 = sphi 0, %s117
      %s134 = sphi 0, %s118
    $region4: #{camera_param_regressor_forward.3} parent=1 // loop_header_branch
      %15 = sbr.rel (%p13) target = $region8
    $region5: #{camera_param_regressor_forward.3} parent=1 // loop_body
      %s17 = ssub.s32 %s12, 1
      %s18 = ssub.s32 %s12, 2
      %s25 = sadd.s32 1, %s20
      %p26 = scmp.ge.s32.totalorder %s25, 4
      %s27 = scalar_select %p26, 0, %s25
      %s28 = sadd.s32 1, %s19
      %s29 = scalar_select %p26, %s28, %s19
      %p30 = scmp.ge.s32.totalorder %s29, 1
      %s31 = scalar_select %p30, 0, %s29
      %s32 = ssub.s32 %s19, %s31
      %p33 = scmp.eq.s32.totalorder %s32, 0
      %s35 = sadd.s32 %s34, 1
      %s36 = scalar_select %p33, %s34, %s35
      %p39 = pneg %p33
      %p40 = scmp.eq.s32.totalorder %s12, 3
      %p41 = por %p39, %p40
      %p42 = scmp.ne.s32.totalorder %s34, %s37
      %p43 = scmp.eq.s32.totalorder %s12, 0
      %p44 = por %p42, %p43
      %p45 = scmp.ne.s32.totalorder %s34, %s37
      %p46 = scmp.eq.s32.totalorder %s17, 3
      %p47 = por %p45, %p46
      %p48 = scmp.ne.s32.totalorder %s37, %s38
      %p49 = scmp.eq.s32.totalorder %s17, 0
      %p50 = por %p48, %p49
      %p51 = scmp.ne.s32.totalorder %s37, %s38
      %p52 = scmp.eq.s32.totalorder %s18, 3
      %p53 = por %p51, %p52
      %p55 = scmp.ne.s32.totalorder %s38, %s54
      %p56 = scmp.eq.s32.totalorder %s18, 0
      %p57 = por %p55, %p56
      %s58 = ssub.s32 %s20, %s27
      %p59 = scmp.eq.s32.totalorder %s58, 0
      %s61 = sadd.s32 %s60, 1
      %s62 = scalar_select %p59, %s60, %s61
      %p65 = pneg %p59
      %p66 = scmp.eq.s32.totalorder %s12, 3
      %p67 = por %p65, %p66
      %p68 = scmp.ne.s32.totalorder %s60, %s63
      %p69 = scmp.eq.s32.totalorder %s12, 0
      %p70 = por %p68, %p69
      %p71 = scmp.ne.s32.totalorder %s60, %s63
      %p72 = scmp.eq.s32.totalorder %s17, 3
      %p73 = por %p71, %p72
      %p74 = scmp.ne.s32.totalorder %s63, %s64
      %p75 = scmp.eq.s32.totalorder %s17, 0
      %p76 = por %p74, %p75
      %p77 = scmp.ne.s32.totalorder %s63, %s64
      %p78 = scmp.eq.s32.totalorder %s18, 3
      %p79 = por %p77, %p78
      %p81 = scmp.ne.s32.totalorder %s64, %s80
      %p82 = scmp.eq.s32.totalorder %s18, 0
      %p83 = por %p81, %p82
      %s84 = ssub.s32 %s20, %s27
      %p85 = scmp.eq.s32.totalorder %s84, 0
      %s87 = sadd.s32 %s86, 1
      %s88 = scalar_select %p85, %s86, %s87
      %p91 = pneg %p85
      %p92 = scmp.eq.s32.totalorder %s12, 3
      %p93 = por %p91, %p92
      %p94 = scmp.ne.s32.totalorder %s86, %s89
      %p95 = scmp.eq.s32.totalorder %s12, 0
      %p96 = por %p94, %p95
      %p97 = scmp.ne.s32.totalorder %s86, %s89
      %p98 = scmp.eq.s32.totalorder %s17, 3
      %p99 = por %p97, %p98
      %p100 = scmp.ne.s32.totalorder %s89, %s90
      %p101 = scmp.eq.s32.totalorder %s17, 0
      %p102 = por %p100, %p101
      %p103 = scmp.ne.s32.totalorder %s89, %s90
      %p104 = scmp.eq.s32.totalorder %s18, 3
      %p105 = por %p103, %p104
      %p107 = scmp.ne.s32.totalorder %s90, %s106
      %p108 = scmp.eq.s32.totalorder %s18, 0
      %p109 = por %p107, %p108
      %s110 = ssub.s32 %s19, %s31
      %s111 = ssub.s32 %s20, %s27
      %s112 = sor.u32 %s110, %s111
      %p113 = scmp.eq.s32.totalorder %s112, 0
      %s115 = sadd.s32 %s114, 1
      %s116 = scalar_select %p113, %s114, %s115
      %p119 = pneg %p113
      %p120 = scmp.eq.s32.totalorder %s12, 3
      %p121 = por %p119, %p120
      %p122 = scmp.ne.s32.totalorder %s114, %s117
      %p123 = scmp.eq.s32.totalorder %s12, 0
      %p124 = por %p122, %p123
      %p125 = scmp.ne.s32.totalorder %s114, %s117
      %p126 = scmp.eq.s32.totalorder %s17, 3
      %p127 = por %p125, %p126
      %p128 = scmp.ne.s32.totalorder %s117, %s118
      %p129 = scmp.eq.s32.totalorder %s17, 0
      %p130 = por %p128, %p129
      %p131 = scmp.ne.s32.totalorder %s117, %s118
      %p132 = scmp.eq.s32.totalorder %s18, 3
      %p133 = por %p131, %p132
      %p135 = scmp.ne.s32.totalorder %s118, %s134
      %p136 = scmp.eq.s32.totalorder %s18, 0
      %p137 = por %p135, %p136
      %p138 = scmp.le.s32.totalorder 1, %s12
      %p139 = scmp.lt.s32.totalorder %s12, 5
      %p140 = pnand %p138, %p139
      %p141 = pneg %p140
      // Predicated region
      $region9: #{camera_param_regressor_forward.3} parent=5 // pred_check
        _
      $region10: #{camera_param_regressor_forward.3} parent=5 // pred_check_branch
        %143 = sbr.rel (%p140) target = $region12
      $region11: #{camera_param_regressor_forward.3} parent=5 // pred_region
        %s144 = ssub.s32 %s12, 1
        // Predicated region
        $region13: #{camera_param_regressor_forward.3} parent=11 // pred_check
          %p145 = pneg %p50
        $region14: #{camera_param_regressor_forward.3} parent=11 // pred_check_branch
          %147 = sbr.rel (%p145) target = $region16
        $region15: #{camera_param_regressor_forward.3} parent=11 // pred_region
          %p148 = scmp.lt.s32.totalorder %s21, 0
          %s149 = scalar_select %p148, %s21, 0
          %s150 = smul.addr %s149, 2
          %s151 = smul.addr %s150, 2
          %s152 = scalar_lea.vmem %s0, %s151
        $region16: #{camera_param_regressor_forward.3} parent=11 // pred_fallthru
          _
      $region12: #{camera_param_regressor_forward.3} parent=5 // pred_fallthru
        _
      %p153 = scmp.lt.s32.totalorder %s12, 4
      // Predicated region
      $region17: #{camera_param_regressor_forward.3} parent=5 // pred_check
        %p154 = pneg %p153
      $region18: #{camera_param_regressor_forward.3} parent=5 // pred_check_branch
        %156 = sbr.rel (%p154) target = $region20
      $region19: #{camera_param_regressor_forward.3} parent=5 // pred_region
        // Predicated region
        $region21: #{camera_param_regressor_forward.3} parent=19 // pred_check
          %p157 = pneg %p70
        $region22: #{camera_param_regressor_forward.3} parent=19 // pred_check_branch
          %159 = sbr.rel (%p157) target = $region24
        $region23: #{camera_param_regressor_forward.3} parent=19 // pred_region
          %s160 = sand.u32 %s60, 1
          %s161 = scalar_lea.sflag [#allocation3], %s160
          %s162 = sand.u32 %s60, 1
          %s163 = smul.addr %s162, 512
          %s164 = scalar_lea.vmem [#allocation2], %s163
          %s165 = smul.u32 2, %s20
          %s167 = ssub.s32 8192, 8192
          %168 = vsyncadd %s161, %s167
          %s169 = smul.addr %s165, 128
          %s170 = scalar_lea.hbm %s1, %s169
          %s171 = sshll.u32 %s164, 4
          %s172 = int_to_ptr.vmem [resolvable:$true] %s171
          %177 = dma.hbm_to_vmem [thread:$0]  %s170, 8192, %s172, %s161, 1024, 256, 16
        $region24: #{camera_param_regressor_forward.3} parent=19 // pred_fallthru
          _
        // Predicated region
        $region25: #{camera_param_regressor_forward.3} parent=19 // pred_check
          %p178 = pneg %p96
        $region26: #{camera_param_regressor_forward.3} parent=19 // pred_check_branch
          %180 = sbr.rel (%p178) target = $region28
        $region27: #{camera_param_regressor_forward.3} parent=19 // pred_region
          %s181 = smul.u32 2, %s20
          %p182 = scmp.lt.s32.totalorder %s181, 7
          %s183 = scalar_select %p182, %s181, 7
          %s184 = scalar_lea.vmem %s2, %s183
          %s185 = smul.u32 2, %s20
        $region28: #{camera_param_regressor_forward.3} parent=19 // pred_fallthru
          _
      $region20: #{camera_param_regressor_forward.3} parent=5 // pred_fallthru
        _
      %p186 = scmp.le.s32.totalorder 1, %s12
      %p187 = scmp.lt.s32.totalorder %s12, 5
      %p188 = pnand %p186, %p187
      %p189 = pneg %p188
      // Predicated region
      $region29: #{camera_param_regressor_forward.3} parent=5 // pred_check
        _
      $region30: #{camera_param_regressor_forward.3} parent=5 // pred_check_branch
        %191 = sbr.rel (%p188) target = $region32
      $region31: #{camera_param_regressor_forward.3} parent=5 // pred_region
        %s192 = ssub.s32 %s12, 1
        %s193 = sand.u32 %s63, 1
        %s194 = scalar_lea.sflag [#allocation3], %s193
        %s195 = sand.u32 %s63, 1
        %s196 = smul.addr %s195, 512
        %s197 = scalar_lea.vmem [#allocation2], %s196
        // Predicated region
        $region33: #{camera_param_regressor_forward.3} parent=31 // pred_check
          %p198 = pneg %p76
        $region34: #{camera_param_regressor_forward.3} parent=31 // pred_check_branch
          %200 = sbr.rel (%p198) target = $region36
        $region35: #{camera_param_regressor_forward.3} parent=31 // pred_region
          %201 = dma.done %s194, 8192
        $region36: #{camera_param_regressor_forward.3} parent=31 // pred_fallthru
          _
        %p202 = scmp.lt.s32.totalorder %s21, 0
        %s203 = scalar_select %p202, %s21, 0
        %s204 = smul.addr %s203, 2
        %s205 = smul.addr %s204, 2
        %s206 = scalar_lea.vmem %s0, %s205
        %p207 = pneg %p50
        %p208 = pneg %p47
        %s209 = sand.u32 %s63, 1
        %s210 = scalar_lea.sflag [#allocation3], %s209
        %s211 = sand.u32 %s63, 1
        %s212 = smul.addr %s211, 512
        %s213 = scalar_lea.vmem [#allocation2], %s212
        %p214 = pneg %p76
        %p215 = pneg %p73
        %s216 = smul.u32 2, %s22
        %p217 = scmp.lt.s32.totalorder %s216, 7
        %s218 = scalar_select %p217, %s216, 7
        %s219 = scalar_lea.vmem %s2, %s218
        %p220 = pneg %p102
        %p221 = pneg %p99
        %p222 = pneg %p130
        %p223 = pneg %p127
        %s224 = smul.u32 2, %s22
        %p225 = scmp.lt.s32.totalorder %s21, 0
        %s226 = scalar_select %p225, %s21, 0
        %p227 = scmp.lt.s32.totalorder %s224, 7
        %s228 = scalar_select %p227, %s224, 7
        %s229 = smul.addr %s226, 8
        %s230 = sadd.s32 %s228, %s229
        %s231 = smul.addr %s230, 2
        %s232 = scalar_lea.vmem %s3, %s231
        %p233 = scmp.lt.s32.totalorder %s21, 0
        %s234 = scalar_select %p233, %s21, 0
        %s235 = smul.addr %s234, 2
        %s236 = smul.addr %s235, 2
        %s237 = scalar_lea.vmem %s0, %s236
        %s238 = smul.u32 2, %s22
        %s239 = smul.u32 2, %s22
        %p240 = scmp.lt.s32.totalorder %s239, 7
        %s241 = scalar_select %p240, %s239, 7
        %s242 = scalar_lea.vmem %s2, %s241
        %s243 = smul.u32 2, %s22
        %s244 = smul.u32 2, %s22
        %p245 = scmp.lt.s32.totalorder %s21, 0
        %s246 = scalar_select %p245, %s21, 0
        %p247 = scmp.lt.s32.totalorder %s244, 7
        %s248 = scalar_select %p247, %s244, 7
        %s249 = smul.addr %s246, 8
        %s250 = sadd.s32 %s248, %s249
        %s251 = smul.addr %s250, 2
        %s252 = scalar_lea.vmem %s3, %s251
        %s253 = smul.u32 2, %s22
        %v254 = vld [vmem:[%s237] sm:$0xf]
        %v255 = vld [vmem:[%s197] sm:$0xff]
        %v256 = vld [vmem:[%s197 + $0x8] sm:$0xff]
        %v257 = vld [vmem:[%s197 + $0x10] sm:$0xff]
        %v258 = vld [vmem:[%s197 + $0x18] sm:$0xff]
        %v259 = vld [vmem:[%s197 + $0x20] sm:$0xff]
        %v260 = vld [vmem:[%s197 + $0x28] sm:$0xff]
        %v261 = vld [vmem:[%s197 + $0x30] sm:$0xff]
        %v262 = vld [vmem:[%s197 + $0x38] sm:$0xff]
        %v263 = vld [vmem:[%s197 + $0x40] sm:$0xff]
        %v264 = vld [vmem:[%s197 + $0x48] sm:$0xff]
        %v265 = vld [vmem:[%s197 + $0x50] sm:$0xff]
        %v266 = vld [vmem:[%s197 + $0x58] sm:$0xff]
        %v267 = vld [vmem:[%s197 + $0x60] sm:$0xff]
        %v268 = vld [vmem:[%s197 + $0x68] sm:$0xff]
        %v269 = vld [vmem:[%s197 + $0x70] sm:$0xff]
        %v270 = vld [vmem:[%s197 + $0x78] sm:$0xff]
        %v271 = vld [vmem:[%s197 + $0x80] sm:$0xff]
        %v272 = vld [vmem:[%s197 + $0x88] sm:$0xff]
        %v273 = vld [vmem:[%s197 + $0x90] sm:$0xff]
        %v274 = vld [vmem:[%s197 + $0x98] sm:$0xff]
        %v275 = vld [vmem:[%s197 + $0xa0] sm:$0xff]
        %v276 = vld [vmem:[%s197 + $0xa8] sm:$0xff]
        %v277 = vld [vmem:[%s197 + $0xb0] sm:$0xff]
        %v278 = vld [vmem:[%s197 + $0xb8] sm:$0xff]
        %v279 = vld [vmem:[%s197 + $0xc0] sm:$0xff]
        %v280 = vld [vmem:[%s197 + $0xc8] sm:$0xff]
        %v281 = vld [vmem:[%s197 + $0xd0] sm:$0xff]
        %v282 = vld [vmem:[%s197 + $0xd8] sm:$0xff]
        %v283 = vld [vmem:[%s197 + $0xe0] sm:$0xff]
        %v284 = vld [vmem:[%s197 + $0xe8] sm:$0xff]
        %v285 = vld [vmem:[%s197 + $0xf0] sm:$0xff]
        %v286 = vld [vmem:[%s197 + $0xf8] sm:$0xff]
        %v287 = vld [vmem:[%s197 + $0x100] sm:$0xff]
        %v288 = vld [vmem:[%s197 + $0x108] sm:$0xff]
        %v289 = vld [vmem:[%s197 + $0x110] sm:$0xff]
        %v290 = vld [vmem:[%s197 + $0x118] sm:$0xff]
        %v291 = vld [vmem:[%s197 + $0x120] sm:$0xff]
        %v292 = vld [vmem:[%s197 + $0x128] sm:$0xff]
        %v293 = vld [vmem:[%s197 + $0x130] sm:$0xff]
        %v294 = vld [vmem:[%s197 + $0x138] sm:$0xff]
        %v295 = vld [vmem:[%s197 + $0x140] sm:$0xff]
        %v296 = vld [vmem:[%s197 + $0x148] sm:$0xff]
        %v297 = vld [vmem:[%s197 + $0x150] sm:$0xff]
        %v298 = vld [vmem:[%s197 + $0x158] sm:$0xff]
        %v299 = vld [vmem:[%s197 + $0x160] sm:$0xff]
        %v300 = vld [vmem:[%s197 + $0x168] sm:$0xff]
        %v301 = vld [vmem:[%s197 + $0x170] sm:$0xff]
        %v302 = vld [vmem:[%s197 + $0x178] sm:$0xff]
        %v303 = vld [vmem:[%s197 + $0x180] sm:$0xff]
        %v304 = vld [vmem:[%s197 + $0x188] sm:$0xff]
        %v305 = vld [vmem:[%s197 + $0x190] sm:$0xff]
        %v306 = vld [vmem:[%s197 + $0x198] sm:$0xff]
        %v307 = vld [vmem:[%s197 + $0x1a0] sm:$0xff]
        %v308 = vld [vmem:[%s197 + $0x1a8] sm:$0xff]
        %v309 = vld [vmem:[%s197 + $0x1b0] sm:$0xff]
        %v310 = vld [vmem:[%s197 + $0x1b8] sm:$0xff]
        %v311 = vld [vmem:[%s197 + $0x1c0] sm:$0xff]
        %v312 = vld [vmem:[%s197 + $0x1c8] sm:$0xff]
        %v313 = vld [vmem:[%s197 + $0x1d0] sm:$0xff]
        %v314 = vld [vmem:[%s197 + $0x1d8] sm:$0xff]
        %v315 = vld [vmem:[%s197 + $0x1e0] sm:$0xff]
        %v316 = vld [vmem:[%s197 + $0x1e8] sm:$0xff]
        %v317 = vld [vmem:[%s197 + $0x1f0] sm:$0xff]
        %v318 = vld [vmem:[%s197 + $0x1f8] sm:$0xff]
        %v319 = vld [vmem:[%s242] sm:$0x3]
        %v321 = vlaneseq
        %v322 = vshrl.u32 %v321, 7
        %v323 = vsub.s32 0, %v322
        %v324 = vrot.slane %v319, %v323
        %v325 = vlaneseq
        %v326 = vshrl.u32 %v325, 7
        %v327 = vsub.s32 1, %v326
        %v328 = vrot.slane %v319, %v327
        %v333 = vunpack.c.l.s4 1983009808
        %v334 = vunpack.c.0.s8 %v333
        %v335 = vlaneseq
        %v336 = vshrl.u32 %v335, 7
        %v337 = vsub.s32 %v334, %v336
        %v338 = vrot.slane %v254, %v337
        %v339 = vcombine.high %v338, %v338
        %342 = vmatprep.subr.mxu0 %v256
        %343 = vmatpush1.msra.mxu0 %v255
        %344 = vmatprep.subr.mxu0 %v258
        %345 = vmatpush1.msra.mxu0 %v257
        %346 = vmatprep.subr.mxu0 %v260
        %347 = vmatpush1.msra.mxu0 %v259
        %348 = vmatprep.subr.mxu0 %v262
        %349 = vmatpush1.msra.mxu0 %v261
        %350 = vmatprep.subr.mxu0 %v264
        %351 = vmatpush1.msra.mxu0 %v263
        %352 = vmatprep.subr.mxu0 %v266
        %353 = vmatpush1.msra.mxu0 %v265
        %354 = vmatprep.subr.mxu0 %v268
        %355 = vmatpush1.msra.mxu0 %v267
        %356 = vmatprep.subr.mxu0 %v270
        %357 = vmatpush1.msra.mxu0 %v269
        %358 = vmatprep.subr.mxu0 %v272
        %359 = vmatpush1.msra.mxu0 %v271
        %360 = vmatprep.subr.mxu0 %v274
        %361 = vmatpush1.msra.mxu0 %v273
        %362 = vmatprep.subr.mxu0 %v276
        %363 = vmatpush1.msra.mxu0 %v275
        %364 = vmatprep.subr.mxu0 %v278
        %365 = vmatpush1.msra.mxu0 %v277
        %366 = vmatprep.subr.mxu0 %v280
        %367 = vmatpush1.msra.mxu0 %v279
        %368 = vmatprep.subr.mxu0 %v282
        %369 = vmatpush1.msra.mxu0 %v281
        %370 = vmatprep.subr.mxu0 %v284
        %371 = vmatpush1.msra.mxu0 %v283
        %372 = vmatprep.subr.mxu0 %v286
        %373 = vmatpush1.msra.mxu0 %v285
        %374 = vmatprep.subr.mxu0 %v288
        %375 = vmatpush1.msra.mxu0 %v287
        %376 = vmatprep.subr.mxu0 %v290
        %377 = vmatpush1.msra.mxu0 %v289
        %378 = vmatprep.subr.mxu0 %v292
        %379 = vmatpush1.msra.mxu0 %v291
        %380 = vmatprep.subr.mxu0 %v294
        %381 = vmatpush1.msra.mxu0 %v293
        %382 = vmatprep.subr.mxu0 %v296
        %383 = vmatpush1.msra.mxu0 %v295
        %384 = vmatprep.subr.mxu0 %v298
        %385 = vmatpush1.msra.mxu0 %v297
        %386 = vmatprep.subr.mxu0 %v300
        %387 = vmatpush1.msra.mxu0 %v299
        %388 = vmatprep.subr.mxu0 %v302
        %389 = vmatpush1.msra.mxu0 %v301
        %390 = vmatprep.subr.mxu0 %v304
        %391 = vmatpush1.msra.mxu0 %v303
        %392 = vmatprep.subr.mxu0 %v306
        %393 = vmatpush1.msra.mxu0 %v305
        %394 = vmatprep.subr.mxu0 %v308
        %395 = vmatpush1.msra.mxu0 %v307
        %396 = vmatprep.subr.mxu0 %v310
        %397 = vmatpush1.msra.mxu0 %v309
        %398 = vmatprep.subr.mxu0 %v312
        %399 = vmatpush1.msra.mxu0 %v311
        %400 = vmatprep.subr.mxu0 %v314
        %401 = vmatpush1.msra.mxu0 %v313
        %402 = vmatprep.subr.mxu0 %v316
        %403 = vmatpush1.msra.mxu0 %v315
        %404 = vmatprep.subr.mxu0 %v318
        %405 = vmatpush1.msra.mxu0 %v317
        %406 = vmatprep.mubr.f32.mxu0 %v339
        %407 = vmatmul.mubr.f32.gmra.mrb[0].mxu0 %v338
        %v408 = vpop.f32.mrb[0].mxu0
        %v409 = vadd.f32 %v324, %v408
        %v410 = vpop.f32.mrb[0].mxu0
        %v411 = vadd.f32 %v328, %v410
        %412 = vdwg.mxu0
        %v413 = vmax.f32 %v409, 0.0
        %v414 = vmax.f32 %v411, 0.0
        %v417 = vcombine.low %v413, %v414
        %v419 = vunpack.c.l.s4 1983009808
        %v420 = vunpack.c.0.s8 %v419
        %v421 = vlaneseq
        %v422 = vshrl.u32 %v421, 7
        %v423 = vsub.s32 %v420, %v422
        %v424 = vrot.slane %v417, %v423
        %426 = vst [vmem:[%s252] sm:$0xf] %v424
        %s427 = smul.u32 2, %s22
        %p428 = scmp.lt.s32.totalorder %s21, 0
        %s429 = scalar_select %p428, %s21, 0
        %p430 = scmp.lt.s32.totalorder %s427, 7
        %s431 = scalar_select %p430, %s427, 7
        %s432 = smul.addr %s429, 8
        %s433 = sadd.s32 %s431, %s432
        %s434 = smul.addr %s433, 2
        %s435 = scalar_lea.vmem %s3, %s434
        // Predicated region
        $region37: #{camera_param_regressor_forward.3} parent=31 // pred_check
          %p436 = pneg %p127
        $region38: #{camera_param_regressor_forward.3} parent=31 // pred_check_branch
          %438 = sbr.rel (%p436) target = $region40
        $region39: #{camera_param_regressor_forward.3} parent=31 // pred_region
          %s439 = smul.u32 2, %s22
        $region40: #{camera_param_regressor_forward.3} parent=31 // pred_fallthru
          _
      $region32: #{camera_param_regressor_forward.3} parent=5 // pred_fallthru
        _
      %p440 = scmp.le.s32.totalorder 2, %s12
      // Predicated region
      $region41: #{camera_param_regressor_forward.3} parent=5 // pred_check
        %p441 = pneg %p440
      $region42: #{camera_param_regressor_forward.3} parent=5 // pred_check_branch
        %443 = sbr.rel (%p441) target = $region44
      $region43: #{camera_param_regressor_forward.3} parent=5 // pred_region
        %s444 = ssub.s32 %s12, 2
        // Predicated region
        $region45: #{camera_param_regressor_forward.3} parent=43 // pred_check
          %p445 = pneg %p133
        $region46: #{camera_param_regressor_forward.3} parent=43 // pred_check_branch
          %447 = sbr.rel (%p445) target = $region48
        $region47: #{camera_param_regressor_forward.3} parent=43 // pred_region
          %s448 = smul.u32 2, %s24
          %p449 = scmp.lt.s32.totalorder %s23, 0
          %s450 = scalar_select %p449, %s23, 0
          %p451 = scmp.lt.s32.totalorder %s448, 7
          %s452 = scalar_select %p451, %s448, 7
          %s453 = smul.addr %s450, 8
          %s454 = sadd.s32 %s452, %s453
          %s455 = smul.addr %s454, 2
          %s456 = scalar_lea.vmem %s3, %s455
        $region48: #{camera_param_regressor_forward.3} parent=43 // pred_fallthru
          _
      $region44: #{camera_param_regressor_forward.3} parent=5 // pred_fallthru
        _
    $region6: #{camera_param_regressor_forward.3} parent=1 // loop_footer
      %s16 = sadd.s32 1, %s12
    $region7: #{camera_param_regressor_forward.3} parent=1 // loop_footer_branch
      %11 = sbr.rel target = $region3
    $region8: #{camera_param_regressor_forward.3} parent=1 // loop_exit
      _
    %457 = vsyncpa [#allocation3], 1
    %s458 = scalar_lea.sflag [#allocation3], 1
    %459 = vsyncpa %s458, 1

// kernel: camera_param_regressor_forward.4
$region0: #{camera_param_regressor_forward.4}
  #allocation0 [shape = 'u32[]', space=smem, size = 0x4, offset = 0x4, fixed_abs, tag = 'smem constant byte address 0x4 - core index']
  #allocation1 [shape = 'u32[144,128]{1,0:T(1,128)}', space=vmem, size = 0x12000, scoped, tag = 'internal scratch']
  %s0 = inlined_call_operand.vmem [shape: f32[2,1024], index: 0, kind: input, shape index: {}]
  %s1 = inlined_call_operand.vmem [shape: f32[1024,128], index: 1, kind: input, shape index: {}]
  %s2 = inlined_call_operand.vmem [shape: f32[1,128], index: 2, kind: input, shape index: {}]
  %s3 = inlined_call_operand.vmem [shape: f32[2,128], index: 3, kind: output, shape index: {}]
  %s4 = sld [smem:[#allocation0]]
  $region22: #{camera_param_regressor_forward.4} parent=0
    _
  %s6 = ssub.s32 1, %s4
  %s7 = scalar_select 0, %s6, %s4
  // Predicated region
  $region2: #{camera_param_regressor_forward.4} parent=0 // pred_check
    _
  $region3: #{camera_param_regressor_forward.4} parent=0 // pred_check_branch
    %9 = sbr.rel (0) target = $region5
  $region4: #{camera_param_regressor_forward.4} parent=0 // pred_region
    _
  $region5: #{camera_param_regressor_forward.4} parent=0 // pred_fallthru
    _
  // Predicated region
  $region6: #{camera_param_regressor_forward.4} parent=0 // pred_check
    _
  $region7: #{camera_param_regressor_forward.4} parent=0 // pred_check_branch
    %11 = sbr.rel (0) target = $region9
  $region8: #{camera_param_regressor_forward.4} parent=0 // pred_region
    _
  $region9: #{camera_param_regressor_forward.4} parent=0 // pred_fallthru
    _
  // Predicated region
  $region10: #{camera_param_regressor_forward.4} parent=0 // pred_check
    _
  $region11: #{camera_param_regressor_forward.4} parent=0 // pred_check_branch
    %13 = sbr.rel (0) target = $region13
  $region12: #{camera_param_regressor_forward.4} parent=0 // pred_region
    _
  $region13: #{camera_param_regressor_forward.4} parent=0 // pred_fallthru
    _
  %v14 = vld [vmem:[%s0] sm:$0xff]
  %v15 = vld [vmem:[%s0 + $0x8] sm:$0xff]
  %v16 = vld [vmem:[%s1] sm:$0xff]
  %v17 = vld [vmem:[%s1 + $0x8] sm:$0xff]
  %v18 = vld [vmem:[%s1 + $0x10] sm:$0xff]
  %v19 = vld [vmem:[%s1 + $0x18] sm:$0xff]
  %v20 = vld [vmem:[%s1 + $0x20] sm:$0xff]
  %v21 = vld [vmem:[%s1 + $0x28] sm:$0xff]
  %v22 = vld [vmem:[%s1 + $0x30] sm:$0xff]
  %v23 = vld [vmem:[%s1 + $0x38] sm:$0xff]
  %v24 = vld [vmem:[%s1 + $0x40] sm:$0xff]
  %v25 = vld [vmem:[%s1 + $0x48] sm:$0xff]
  %v26 = vld [vmem:[%s1 + $0x50] sm:$0xff]
  %v27 = vld [vmem:[%s1 + $0x58] sm:$0xff]
  %v28 = vld [vmem:[%s1 + $0x60] sm:$0xff]
  %v29 = vld [vmem:[%s1 + $0x68] sm:$0xff]
  %v30 = vld [vmem:[%s1 + $0x70] sm:$0xff]
  %v31 = vld [vmem:[%s1 + $0x78] sm:$0xff]
  %v32 = vld [vmem:[%s1 + $0x80] sm:$0xff]
  %v33 = vld [vmem:[%s1 + $0x88] sm:$0xff]
  %v34 = vld [vmem:[%s1 + $0x90] sm:$0xff]
  %v35 = vld [vmem:[%s1 + $0x98] sm:$0xff]
  %v36 = vld [vmem:[%s1 + $0xa0] sm:$0xff]
  %v37 = vld [vmem:[%s1 + $0xa8] sm:$0xff]
  %v38 = vld [vmem:[%s1 + $0xb0] sm:$0xff]
  %v39 = vld [vmem:[%s1 + $0xb8] sm:$0xff]
  %v40 = vld [vmem:[%s1 + $0xc0] sm:$0xff]
  %v41 = vld [vmem:[%s1 + $0xc8] sm:$0xff]
  %v42 = vld [vmem:[%s1 + $0xd0] sm:$0xff]
  %v43 = vld [vmem:[%s1 + $0xd8] sm:$0xff]
  %v44 = vld [vmem:[%s1 + $0xe0] sm:$0xff]
  %v45 = vld [vmem:[%s1 + $0xe8] sm:$0xff]
  %v46 = vld [vmem:[%s1 + $0xf0] sm:$0xff]
  %v47 = vld [vmem:[%s1 + $0xf8] sm:$0xff]
  %v48 = vld [vmem:[%s1 + $0x100] sm:$0xff]
  %v49 = vld [vmem:[%s1 + $0x108] sm:$0xff]
  %v50 = vld [vmem:[%s1 + $0x110] sm:$0xff]
  %v51 = vld [vmem:[%s1 + $0x118] sm:$0xff]
  %v52 = vld [vmem:[%s1 + $0x120] sm:$0xff]
  %v53 = vld [vmem:[%s1 + $0x128] sm:$0xff]
  %v54 = vld [vmem:[%s1 + $0x130] sm:$0xff]
  %v55 = vld [vmem:[%s1 + $0x138] sm:$0xff]
  %v56 = vld [vmem:[%s1 + $0x140] sm:$0xff]
  %v57 = vld [vmem:[%s1 + $0x148] sm:$0xff]
  %v58 = vld [vmem:[%s1 + $0x150] sm:$0xff]
  %v59 = vld [vmem:[%s1 + $0x158] sm:$0xff]
  %v60 = vld [vmem:[%s1 + $0x160] sm:$0xff]
  %v61 = vld [vmem:[%s1 + $0x168] sm:$0xff]
  %v62 = vld [vmem:[%s1 + $0x170] sm:$0xff]
  %v63 = vld [vmem:[%s1 + $0x178] sm:$0xff]
  %v64 = vld [vmem:[%s1 + $0x180] sm:$0xff]
  %v65 = vld [vmem:[%s1 + $0x188] sm:$0xff]
  %v66 = vld [vmem:[%s1 + $0x190] sm:$0xff]
  %v67 = vld [vmem:[%s1 + $0x198] sm:$0xff]
  %v68 = vld [vmem:[%s1 + $0x1a0] sm:$0xff]
  %v69 = vld [vmem:[%s1 + $0x1a8] sm:$0xff]
  %v70 = vld [vmem:[%s1 + $0x1b0] sm:$0xff]
  %v71 = vld [vmem:[%s1 + $0x1b8] sm:$0xff]
  %v72 = vld [vmem:[%s1 + $0x1c0] sm:$0xff]
  %v73 = vld [vmem:[%s1 + $0x1c8] sm:$0xff]
  %v74 = vld [vmem:[%s1 + $0x1d0] sm:$0xff]
  %v75 = vld [vmem:[%s1 + $0x1d8] sm:$0xff]
  %v76 = vld [vmem:[%s1 + $0x1e0] sm:$0xff]
  %v77 = vld [vmem:[%s1 + $0x1e8] sm:$0xff]
  %v78 = vld [vmem:[%s1 + $0x1f0] sm:$0xff]
  %v79 = vld [vmem:[%s1 + $0x1f8] sm:$0xff]
  %v80 = vld [vmem:[%s1 + $0x200] sm:$0xff]
  %v81 = vld [vmem:[%s1 + $0x208] sm:$0xff]
  %v82 = vld [vmem:[%s1 + $0x210] sm:$0xff]
  %v83 = vld [vmem:[%s1 + $0x218] sm:$0xff]
  %v84 = vld [vmem:[%s1 + $0x220] sm:$0xff]
  %v85 = vld [vmem:[%s1 + $0x228] sm:$0xff]
  %v86 = vld [vmem:[%s1 + $0x230] sm:$0xff]
  %v87 = vld [vmem:[%s1 + $0x238] sm:$0xff]
  %v88 = vld [vmem:[%s1 + $0x240] sm:$0xff]
  %v89 = vld [vmem:[%s1 + $0x248] sm:$0xff]
  %v90 = vld [vmem:[%s1 + $0x250] sm:$0xff]
  %v91 = vld [vmem:[%s1 + $0x258] sm:$0xff]
  %v92 = vld [vmem:[%s1 + $0x260] sm:$0xff]
  %v93 = vld [vmem:[%s1 + $0x268] sm:$0xff]
  %v94 = vld [vmem:[%s1 + $0x270] sm:$0xff]
  %v95 = vld [vmem:[%s1 + $0x278] sm:$0xff]
  %v96 = vld [vmem:[%s1 + $0x280] sm:$0xff]
  %v97 = vld [vmem:[%s1 + $0x288] sm:$0xff]
  %v98 = vld [vmem:[%s1 + $0x290] sm:$0xff]
  %v99 = vld [vmem:[%s1 + $0x298] sm:$0xff]
  %v100 = vld [vmem:[%s1 + $0x2a0] sm:$0xff]
  %v101 = vld [vmem:[%s1 + $0x2a8] sm:$0xff]
  %v102 = vld [vmem:[%s1 + $0x2b0] sm:$0xff]
  %v103 = vld [vmem:[%s1 + $0x2b8] sm:$0xff]
  %v104 = vld [vmem:[%s1 + $0x2c0] sm:$0xff]
  %v105 = vld [vmem:[%s1 + $0x2c8] sm:$0xff]
  %v106 = vld [vmem:[%s1 + $0x2d0] sm:$0xff]
  %v107 = vld [vmem:[%s1 + $0x2d8] sm:$0xff]
  %v108 = vld [vmem:[%s1 + $0x2e0] sm:$0xff]
  %v109 = vld [vmem:[%s1 + $0x2e8] sm:$0xff]
  %v110 = vld [vmem:[%s1 + $0x2f0] sm:$0xff]
  %v111 = vld [vmem:[%s1 + $0x2f8] sm:$0xff]
  %v112 = vld [vmem:[%s1 + $0x300] sm:$0xff]
  %v113 = vld [vmem:[%s1 + $0x308] sm:$0xff]
  %v114 = vld [vmem:[%s1 + $0x310] sm:$0xff]
  %v115 = vld [vmem:[%s1 + $0x318] sm:$0xff]
  %v116 = vld [vmem:[%s1 + $0x320] sm:$0xff]
  %v117 = vld [vmem:[%s1 + $0x328] sm:$0xff]
  %v118 = vld [vmem:[%s1 + $0x330] sm:$0xff]
  %v119 = vld [vmem:[%s1 + $0x338] sm:$0xff]
  %v120 = vld [vmem:[%s1 + $0x340] sm:$0xff]
  %v121 = vld [vmem:[%s1 + $0x348] sm:$0xff]
  %v122 = vld [vmem:[%s1 + $0x350] sm:$0xff]
  %v123 = vld [vmem:[%s1 + $0x358] sm:$0xff]
  %v124 = vld [vmem:[%s1 + $0x360] sm:$0xff]
  %v125 = vld [vmem:[%s1 + $0x368] sm:$0xff]
  %v126 = vld [vmem:[%s1 + $0x370] sm:$0xff]
  %v127 = vld [vmem:[%s1 + $0x378] sm:$0xff]
  %v128 = vld [vmem:[%s1 + $0x380] sm:$0xff]
  %v129 = vld [vmem:[%s1 + $0x388] sm:$0xff]
  %v130 = vld [vmem:[%s1 + $0x390] sm:$0xff]
  %v131 = vld [vmem:[%s1 + $0x398] sm:$0xff]
  %v132 = vld [vmem:[%s1 + $0x3a0] sm:$0xff]
  %v133 = vld [vmem:[%s1 + $0x3a8] sm:$0xff]
  %v134 = vld [vmem:[%s1 + $0x3b0] sm:$0xff]
  %v135 = vld [vmem:[%s1 + $0x3b8] sm:$0xff]
  %v136 = vld [vmem:[%s1 + $0x3c0] sm:$0xff]
  %v137 = vld [vmem:[%s1 + $0x3c8] sm:$0xff]
  %v138 = vld [vmem:[%s1 + $0x3d0] sm:$0xff]
  %v139 = vld [vmem:[%s1 + $0x3d8] sm:$0xff]
  %v140 = vld [vmem:[%s1 + $0x3e0] sm:$0xff]
  %v141 = vld [vmem:[%s1 + $0x3e8] sm:$0xff]
  %v142 = vld [vmem:[%s1 + $0x3f0] sm:$0xff]
  %v143 = vld [vmem:[%s1 + $0x3f8] sm:$0xff]
  %v144 = vld [vmem:[%s2] sm:$0x1]
  %v146 = vlaneseq
  %v147 = vshrl.u32 %v146, 7
  %v148 = vsub.s32 0, %v147
  %v149 = vrot.slane %v144, %v148
  %v153 = vcombine.high %v14, %v14
  %v155 = vunpack.c.l.s4 1983009808
  %v156 = vunpack.c.0.s8 %v155
  %v157 = vlaneseq
  %v158 = vshrl.u32 %v157, 7
  %v159 = vsub.s32 %v156, %v158
  %v160 = vrot.slane %v14, %v159
  %v162 = vunpack.c.l.s4 1983009808
  %v163 = vunpack.c.0.s8 %v162
  %v164 = vlaneseq
  %v165 = vshrl.u32 %v164, 7
  %v166 = vsub.s32 %v163, %v165
  %v167 = vrot.slane %v153, %v166
  %v168 = vcombine.high %v160, %v160
  %v169 = vcombine.high %v167, %v167
  %v170 = vcombine.high %v15, %v15
  %v172 = vunpack.c.l.s4 1983009808
  %v173 = vunpack.c.0.s8 %v172
  %v174 = vlaneseq
  %v175 = vshrl.u32 %v174, 7
  %v176 = vsub.s32 %v173, %v175
  %v177 = vrot.slane %v15, %v176
  %v179 = vunpack.c.l.s4 1983009808
  %v180 = vunpack.c.0.s8 %v179
  %v181 = vlaneseq
  %v182 = vshrl.u32 %v181, 7
  %v183 = vsub.s32 %v180, %v182
  %v184 = vrot.slane %v170, %v183
  %v185 = vcombine.high %v177, %v177
  %v186 = vcombine.high %v184, %v184
  %195 = vmatprep.subr.mxu0 0.0
  %196 = vmatpush1.msra.mxu0 %v16
  %197 = vmatprep.subr.mxu0 0.0
  %198 = vmatpush1.msra.mxu0 %v17
  %199 = vmatprep.subr.mxu0 0.0
  %200 = vmatpush1.msra.mxu0 %v18
  %201 = vmatprep.subr.mxu0 0.0
  %202 = vmatpush1.msra.mxu0 %v19
  %203 = vmatprep.subr.mxu0 0.0
  %204 = vmatpush1.msra.mxu0 %v20
  %205 = vmatprep.subr.mxu0 0.0
  %206 = vmatpush1.msra.mxu0 %v21
  %207 = vmatprep.subr.mxu0 0.0
  %208 = vmatpush1.msra.mxu0 %v22
  %209 = vmatprep.subr.mxu0 0.0
  %210 = vmatpush1.msra.mxu0 %v23
  %211 = vmatprep.subr.mxu0 0.0
  %212 = vmatpush1.msra.mxu0 %v24
  %213 = vmatprep.subr.mxu0 0.0
  %214 = vmatpush1.msra.mxu0 %v25
  %215 = vmatprep.subr.mxu0 0.0
  %216 = vmatpush1.msra.mxu0 %v26
  %217 = vmatprep.subr.mxu0 0.0
  %218 = vmatpush1.msra.mxu0 %v27
  %219 = vmatprep.subr.mxu0 0.0
  %220 = vmatpush1.msra.mxu0 %v28
  %221 = vmatprep.subr.mxu0 0.0
  %222 = vmatpush1.msra.mxu0 %v29
  %223 = vmatprep.subr.mxu0 0.0
  %224 = vmatpush1.msra.mxu0 %v30
  %225 = vmatprep.subr.mxu0 0.0
  %226 = vmatpush1.msra.mxu0 %v31
  %227 = vmatprep.subr.mxu0 0.0
  %228 = vmatpush1.msra.mxu0 %v32
  %229 = vmatprep.subr.mxu0 0.0
  %230 = vmatpush1.msra.mxu0 %v33
  %231 = vmatprep.subr.mxu0 0.0
  %232 = vmatpush1.msra.mxu0 %v34
  %233 = vmatprep.subr.mxu0 0.0
  %234 = vmatpush1.msra.mxu0 %v35
  %235 = vmatprep.subr.mxu0 0.0
  %236 = vmatpush1.msra.mxu0 %v36
  %237 = vmatprep.subr.mxu0 0.0
  %238 = vmatpush1.msra.mxu0 %v37
  %239 = vmatprep.subr.mxu0 0.0
  %240 = vmatpush1.msra.mxu0 %v38
  %241 = vmatprep.subr.mxu0 0.0
  %242 = vmatpush1.msra.mxu0 %v39
  %243 = vmatprep.subr.mxu0 0.0
  %244 = vmatpush1.msra.mxu0 %v40
  %245 = vmatprep.subr.mxu0 0.0
  %246 = vmatpush1.msra.mxu0 %v41
  %247 = vmatprep.subr.mxu0 0.0
  %248 = vmatpush1.msra.mxu0 %v42
  %249 = vmatprep.subr.mxu0 0.0
  %250 = vmatpush1.msra.mxu0 %v43
  %251 = vmatprep.subr.mxu0 0.0
  %252 = vmatpush1.msra.mxu0 %v44
  %253 = vmatprep.subr.mxu0 0.0
  %254 = vmatpush1.msra.mxu0 %v45
  %255 = vmatprep.subr.mxu0 0.0
  %256 = vmatpush1.msra.mxu0 %v46
  %257 = vmatprep.subr.mxu0 0.0
  %258 = vmatpush1.msra.mxu0 %v47
  %259 = vmatprep.mubr.f32.mxu0 %v168
  %260 = vmatmul.mubr.f32.gmra.mrb[0].mxu0 %v160
  %v261 = vpop.f32.mrb[0].mxu0
  %v262 = vadd.f32 %v149, %v261
  %v263 = vpop.f32.mrb[0].mxu0
  %264 = vdwg.mxu0
  %265 = vmatprep.subr.mxu0 0.0
  %266 = vmatpush1.msra.mxu0 %v48
  %267 = vmatprep.subr.mxu0 0.0
  %268 = vmatpush1.msra.mxu0 %v49
  %269 = vmatprep.subr.mxu0 0.0
  %270 = vmatpush1.msra.mxu0 %v50
  %271 = vmatprep.subr.mxu0 0.0
  %272 = vmatpush1.msra.mxu0 %v51
  %273 = vmatprep.subr.mxu0 0.0
  %274 = vmatpush1.msra.mxu0 %v52
  %275 = vmatprep.subr.mxu0 0.0
  %276 = vmatpush1.msra.mxu0 %v53
  %277 = vmatprep.subr.mxu0 0.0
  %278 = vmatpush1.msra.mxu0 %v54
  %279 = vmatprep.subr.mxu0 0.0
  %280 = vmatpush1.msra.mxu0 %v55
  %281 = vmatprep.subr.mxu0 0.0
  %282 = vmatpush1.msra.mxu0 %v56
  %283 = vmatprep.subr.mxu0 0.0
  %284 = vmatpush1.msra.mxu0 %v57
  %285 = vmatprep.subr.mxu0 0.0
  %286 = vmatpush1.msra.mxu0 %v58
  %287 = vmatprep.subr.mxu0 0.0
  %288 = vmatpush1.msra.mxu0 %v59
  %289 = vmatprep.subr.mxu0 0.0
  %290 = vmatpush1.msra.mxu0 %v60
  %291 = vmatprep.subr.mxu0 0.0
  %292 = vmatpush1.msra.mxu0 %v61
  %293 = vmatprep.subr.mxu0 0.0
  %294 = vmatpush1.msra.mxu0 %v62
  %295 = vmatprep.subr.mxu0 0.0
  %296 = vmatpush1.msra.mxu0 %v63
  %297 = vmatprep.subr.mxu0 0.0
  %298 = vmatpush1.msra.mxu0 %v64
  %299 = vmatprep.subr.mxu0 0.0
  %300 = vmatpush1.msra.mxu0 %v65
  %301 = vmatprep.subr.mxu0 0.0
  %302 = vmatpush1.msra.mxu0 %v66
  %303 = vmatprep.subr.mxu0 0.0
  %304 = vmatpush1.msra.mxu0 %v67
  %305 = vmatprep.subr.mxu0 0.0
  %306 = vmatpush1.msra.mxu0 %v68
  %307 = vmatprep.subr.mxu0 0.0
  %308 = vmatpush1.msra.mxu0 %v69
  %309 = vmatprep.subr.mxu0 0.0
  %310 = vmatpush1.msra.mxu0 %v70
  %311 = vmatprep.subr.mxu0 0.0
  %312 = vmatpush1.msra.mxu0 %v71
  %313 = vmatprep.subr.mxu0 0.0
  %314 = vmatpush1.msra.mxu0 %v72
  %315 = vmatprep.subr.mxu0 0.0
  %316 = vmatpush1.msra.mxu0 %v73
  %317 = vmatprep.subr.mxu0 0.0
  %318 = vmatpush1.msra.mxu0 %v74
  %319 = vmatprep.subr.mxu0 0.0
  %320 = vmatpush1.msra.mxu0 %v75
  %321 = vmatprep.subr.mxu0 0.0
  %322 = vmatpush1.msra.mxu0 %v76
  %323 = vmatprep.subr.mxu0 0.0
  %324 = vmatpush1.msra.mxu0 %v77
  %325 = vmatprep.subr.mxu0 0.0
  %326 = vmatpush1.msra.mxu0 %v78
  %327 = vmatprep.subr.mxu0 0.0
  %328 = vmatpush1.msra.mxu0 %v79
  %329 = vmatprep.mubr.f32.mxu0 %v169
  %330 = vmatmul.mubr.f32.gmra.mrb[0].mxu0 %v167
  %v331 = vpop.f32.mrb[0].mxu0
  %v332 = vadd.f32 %v262, %v331
  %v333 = vpop.f32.mrb[0].mxu0
  %334 = vdwg.mxu0
  %335 = vmatprep.subr.mxu0 0.0
  %336 = vmatpush1.msra.mxu0 %v80
  %337 = vmatprep.subr.mxu0 0.0
  %338 = vmatpush1.msra.mxu0 %v81
  %339 = vmatprep.subr.mxu0 0.0
  %340 = vmatpush1.msra.mxu0 %v82
  %341 = vmatprep.subr.mxu0 0.0
  %342 = vmatpush1.msra.mxu0 %v83
  %343 = vmatprep.subr.mxu0 0.0
  %344 = vmatpush1.msra.mxu0 %v84
  %345 = vmatprep.subr.mxu0 0.0
  %346 = vmatpush1.msra.mxu0 %v85
  %347 = vmatprep.subr.mxu0 0.0
  %348 = vmatpush1.msra.mxu0 %v86
  %349 = vmatprep.subr.mxu0 0.0
  %350 = vmatpush1.msra.mxu0 %v87
  %351 = vmatprep.subr.mxu0 0.0
  %352 = vmatpush1.msra.mxu0 %v88
  %353 = vmatprep.subr.mxu0 0.0
  %354 = vmatpush1.msra.mxu0 %v89
  %355 = vmatprep.subr.mxu0 0.0
  %356 = vmatpush1.msra.mxu0 %v90
  %357 = vmatprep.subr.mxu0 0.0
  %358 = vmatpush1.msra.mxu0 %v91
  %359 = vmatprep.subr.mxu0 0.0
  %360 = vmatpush1.msra.mxu0 %v92
  %361 = vmatprep.subr.mxu0 0.0
  %362 = vmatpush1.msra.mxu0 %v93
  %363 = vmatprep.subr.mxu0 0.0
  %364 = vmatpush1.msra.mxu0 %v94
  %365 = vmatprep.subr.mxu0 0.0
  %366 = vmatpush1.msra.mxu0 %v95
  %367 = vmatprep.subr.mxu0 0.0
  %368 = vmatpush1.msra.mxu0 %v96
  %369 = vmatprep.subr.mxu0 0.0
  %370 = vmatpush1.msra.mxu0 %v97
  %371 = vmatprep.subr.mxu0 0.0
  %372 = vmatpush1.msra.mxu0 %v98
  %373 = vmatprep.subr.mxu0 0.0
  %374 = vmatpush1.msra.mxu0 %v99
  %375 = vmatprep.subr.mxu0 0.0
  %376 = vmatpush1.msra.mxu0 %v100
  %377 = vmatprep.subr.mxu0 0.0
  %378 = vmatpush1.msra.mxu0 %v101
  %379 = vmatprep.subr.mxu0 0.0
  %380 = vmatpush1.msra.mxu0 %v102
  %381 = vmatprep.subr.mxu0 0.0
  %382 = vmatpush1.msra.mxu0 %v103
  %383 = vmatprep.subr.mxu0 0.0
  %384 = vmatpush1.msra.mxu0 %v104
  %385 = vmatprep.subr.mxu0 0.0
  %386 = vmatpush1.msra.mxu0 %v105
  %387 = vmatprep.subr.mxu0 0.0
  %388 = vmatpush1.msra.mxu0 %v106
  %389 = vmatprep.subr.mxu0 0.0
  %390 = vmatpush1.msra.mxu0 %v107
  %391 = vmatprep.subr.mxu0 0.0
  %392 = vmatpush1.msra.mxu0 %v108
  %393 = vmatprep.subr.mxu0 0.0
  %394 = vmatpush1.msra.mxu0 %v109
  %395 = vmatprep.subr.mxu0 0.0
  %396 = vmatpush1.msra.mxu0 %v110
  %397 = vmatprep.subr.mxu0 0.0
  %398 = vmatpush1.msra.mxu0 %v111
  %399 = vmatprep.mubr.f32.mxu0 %v185
  %400 = vmatmul.mubr.f32.gmra.mrb[0].mxu0 %v177
  %v401 = vpop.f32.mrb[0].mxu0
  %v402 = vadd.f32 %v332, %v401
  %v403 = vpop.f32.mrb[0].mxu0
  %404 = vdwg.mxu0
  %405 = vmatprep.subr.mxu0 0.0
  %406 = vmatpush1.msra.mxu0 %v112
  %407 = vmatprep.subr.mxu0 0.0
  %408 = vmatpush1.msra.mxu0 %v113
  %409 = vmatprep.subr.mxu0 0.0
  %410 = vmatpush1.msra.mxu0 %v114
  %411 = vmatprep.subr.mxu0 0.0
  %412 = vmatpush1.msra.mxu0 %v115
  %413 = vmatprep.subr.mxu0 0.0
  %414 = vmatpush1.msra.mxu0 %v116
  %415 = vmatprep.subr.mxu0 0.0
  %416 = vmatpush1.msra.mxu0 %v117
  %417 = vmatprep.subr.mxu0 0.0
  %418 = vmatpush1.msra.mxu0 %v118
  %419 = vmatprep.subr.mxu0 0.0
  %420 = vmatpush1.msra.mxu0 %v119
  %421 = vmatprep.subr.mxu0 0.0
  %422 = vmatpush1.msra.mxu0 %v120
  %423 = vmatprep.subr.mxu0 0.0
  %424 = vmatpush1.msra.mxu0 %v121
  %425 = vmatprep.subr.mxu0 0.0
  %426 = vmatpush1.msra.mxu0 %v122
  %427 = vmatprep.subr.mxu0 0.0
  %428 = vmatpush1.msra.mxu0 %v123
  %429 = vmatprep.subr.mxu0 0.0
  %430 = vmatpush1.msra.mxu0 %v124
  %431 = vmatprep.subr.mxu0 0.0
  %432 = vmatpush1.msra.mxu0 %v125
  %433 = vmatprep.subr.mxu0 0.0
  %434 = vmatpush1.msra.mxu0 %v126
  %435 = vmatprep.subr.mxu0 0.0
  %436 = vmatpush1.msra.mxu0 %v127
  %437 = vmatprep.subr.mxu0 0.0
  %438 = vmatpush1.msra.mxu0 %v128
  %439 = vmatprep.subr.mxu0 0.0
  %440 = vmatpush1.msra.mxu0 %v129
  %441 = vmatprep.subr.mxu0 0.0
  %442 = vmatpush1.msra.mxu0 %v130
  %443 = vmatprep.subr.mxu0 0.0
  %444 = vmatpush1.msra.mxu0 %v131
  %445 = vmatprep.subr.mxu0 0.0
  %446 = vmatpush1.msra.mxu0 %v132
  %447 = vmatprep.subr.mxu0 0.0
  %448 = vmatpush1.msra.mxu0 %v133
  %449 = vmatprep.subr.mxu0 0.0
  %450 = vmatpush1.msra.mxu0 %v134
  %451 = vmatprep.subr.mxu0 0.0
  %452 = vmatpush1.msra.mxu0 %v135
  %453 = vmatprep.subr.mxu0 0.0
  %454 = vmatpush1.msra.mxu0 %v136
  %455 = vmatprep.subr.mxu0 0.0
  %456 = vmatpush1.msra.mxu0 %v137
  %457 = vmatprep.subr.mxu0 0.0
  %458 = vmatpush1.msra.mxu0 %v138
  %459 = vmatprep.subr.mxu0 0.0
  %460 = vmatpush1.msra.mxu0 %v139
  %461 = vmatprep.subr.mxu0 0.0
  %462 = vmatpush1.msra.mxu0 %v140
  %463 = vmatprep.subr.mxu0 0.0
  %464 = vmatpush1.msra.mxu0 %v141
  %465 = vmatprep.subr.mxu0 0.0
  %466 = vmatpush1.msra.mxu0 %v142
  %467 = vmatprep.subr.mxu0 0.0
  %468 = vmatpush1.msra.mxu0 %v143
  %469 = vmatprep.mubr.f32.mxu0 %v186
  %470 = vmatmul.mubr.f32.gmra.mrb[0].mxu0 %v184
  %v471 = vpop.f32.mrb[0].mxu0
  %v472 = vadd.f32 %v402, %v471
  %v473 = vpop.f32.mrb[0].mxu0
  %474 = vdwg.mxu0
  %v475 = vmax.f32 %v472, 0.0
  %476 = vst [vmem:[%s3] sm:$0x3] %v475
  // Predicated region
  $region14: #{camera_param_regressor_forward.4} parent=0 // pred_check
    _
  $region15: #{camera_param_regressor_forward.4} parent=0 // pred_check_branch
    %478 = sbr.rel (0) target = $region17
  $region16: #{camera_param_regressor_forward.4} parent=0 // pred_region
    _
  $region17: #{camera_param_regressor_forward.4} parent=0 // pred_fallthru
    _
  // Predicated region
  $region18: #{camera_param_regressor_forward.4} parent=0 // pred_check
    _
  $region19: #{camera_param_regressor_forward.4} parent=0 // pred_check_branch
    %480 = sbr.rel (0) target = $region21
  $region20: #{camera_param_regressor_forward.4} parent=0 // pred_region
    _
  $region21: #{camera_param_regressor_forward.4} parent=0 // pred_fallthru
    _

</llo_original>
